<compile_context>
chip_gen: v7x
topology: tpu7x:2x2x1
jax: 0.10.0
libtpu: 0.0.40
codegen_flags: <defaults>
</compile_context>

<pallas_src>
import functools

import jax
import jax.numpy as jnp
from jax import lax
from jax.experimental import pallas as pl
from jax.experimental.pallas import tpu as pltpu


# ----------------------------------------------------------------------------
# Fused Linear -> ReLU -> Linear -> LayerNorm kernel (packed, lane-dense layout)
# ----------------------------------------------------------------------------
def _ffn_kernel(x_ref, w1_ref, b1_ref, w2_ref, b2_ref, g_ref, bt_ref, m_ref,
                o_ref, *, use_ln, eps):
    x = x_ref[...]                                                    # (tn, P*D)
    h = jnp.dot(x, w1_ref[...], preferred_element_type=jnp.float32) + b1_ref[...]
    h = jnp.maximum(h, 0.0)                                           # ReLU
    y = jnp.dot(h, w2_ref[...], preferred_element_type=jnp.float32) + b2_ref[...]
    if use_ln:
        # Per-token (group of D lanes) statistics via a block-diagonal averaging
        # matmul -- keeps everything lane-dense, single pass for the variance.
        mu = jnp.dot(y, m_ref[...], preferred_element_type=jnp.float32)
        ey2 = jnp.dot(y * y, m_ref[...], preferred_element_type=jnp.float32)
        var = ey2 - mu * mu
        inv = lax.rsqrt(var + eps)                                    # EUP slot
        y = (y - mu) * (inv * g_ref[...]) + bt_ref[...]
    o_ref[...] = y


def feed_forward(x, params, *, layer_norm=True, eps=1e-5, max_tile_rows=2048):
    """FeedForward forward pass.

    x: (..., D) float array.
    params: (W1, b1, W2, b2, gamma, beta) with weights stored as (in, out),
            i.e. W1: (D, H), W2: (H, D)   (H = dim * factor).
    """
    orig_shape = x.shape
    orig_dtype = x.dtype
    D = orig_shape[-1]
    x2d = x.reshape(-1, D).astype(jnp.float32)
    N = x2d.shape[0]

    W1, b1, W2, b2, g, bt = [jnp.asarray(p, jnp.float32) for p in params]
    H = W1.shape[1]

    # ----- lane-dense token packing ------------------------------------------
    P = 128 // D if (D <= 128 and 128 % D == 0) else 1
    PD, PH = P * D, P * H

    # Balanced, 8-aligned row tiles: waste is at most a few sublanes per tile
    # (instead of padding up to a full fixed tile).
    Np = pl.cdiv(N, P)                          # packed rows actually needed
    num_tiles = pl.cdiv(Np, max_tile_rows)
    tn = max(8, ((pl.cdiv(Np, num_tiles) + 7) // 8) * 8)
    Np_pad = num_tiles * tn
    N_pad = Np_pad * P
    if N_pad != N:
        x2d = jnp.pad(x2d, ((0, N_pad - N), (0, 0)))
    xp = x2d.reshape(Np_pad, PD)                # free row-major reshape

    # Block-diagonal packed weights (built once at trace time).
    eyeP = jnp.eye(P, dtype=jnp.float32)
    Wb1 = jnp.kron(eyeP, W1)                                        # (PD, PH)
    Wb2 = jnp.kron(eyeP, W2)                                        # (PH, PD)
    Mavg = jnp.kron(eyeP, jnp.full((D, D), 1.0 / D, jnp.float32))   # (PD, PD)
    b1p = jnp.tile(b1.reshape(1, H), (1, P))                        # (1, PH)
    b2p = jnp.tile(b2.reshape(1, D), (1, P))                        # (1, PD)
    gp = jnp.tile(g.reshape(1, D), (1, P))                          # (1, PD)
    btp = jnp.tile(bt.reshape(1, D), (1, P))                        # (1, PD)

    # VMEM budget @ tn=2048, PD=128: x + out double-buffered = 4 MiB,
    # weights < 1 MiB -> ~5 MiB total, safe on v5e/v6e (128 MiB) and v7x (64 MiB).
    grid = (num_tiles,)
    kernel = functools.partial(_ffn_kernel, use_ln=layer_norm, eps=eps)
    out = pl.pallas_call(
        kernel,
        grid=grid,
        in_specs=[pl.BlockSpec((tn, PD), lambda i: (i, 0)),
                  pl.BlockSpec((PD, PH), lambda i: (0, 0)),
                  pl.BlockSpec((1, PH), lambda i: (0, 0)),
                  pl.BlockSpec((PH, PD), lambda i: (0, 0)),
                  pl.BlockSpec((1, PD), lambda i: (0, 0)),
                  pl.BlockSpec((1, PD), lambda i: (0, 0)),
                  pl.BlockSpec((1, PD), lambda i: (0, 0)),
                  pl.BlockSpec((PD, PD), lambda i: (0, 0))],
        out_specs=pl.BlockSpec((tn, PD), lambda i: (i, 0)),
        out_shape=jax.ShapeDtypeStruct((Np_pad, PD), jnp.float32),
        compiler_params=pltpu.CompilerParams(
            dimension_semantics=("parallel",),
            vmem_limit_bytes=32 * 1024 * 1024),
    )(xp, Wb1, b1p, Wb2, b2p, gp, btp, Mavg)

    out = out.reshape(N_pad, D)[:N]             # drop padded tokens
    return out.reshape(orig_shape).astype(orig_dtype)

# TODO(synk): only the configured instance (n_layers=2, ff_weight_norm=False,
# dropout=0.0 eval) is fused; weight_norm would be folded into the dense weight
# at trace time and train-mode dropout (RNG masking) is not implemented.


# ----------------------------------------------------------------------------
# Pure-JAX reference (mirrors the PyTorch module) for validation.
# ----------------------------------------------------------------------------
def _ref_feed_forward(x2d, params, eps=1e-5):
    W1, b1, W2, b2, g, bt = params
    h = jnp.maximum(x2d @ W1 + b1, 0.0)
    y = h @ W2 + b2
    mu = jnp.mean(y, -1, keepdims=True)
    var = jnp.mean((y - mu) ** 2, -1, keepdims=True)
    return (y - mu) / jnp.sqrt(var + eps) * g + bt


# ----------------------------------------------------------------------------
if __name__ == "__main__":
    # FeedForward(dim=4, factor=2, ff_weight_norm=False, n_layers=2,
    #             layer_norm=True, dropout=0.0) applied over a (B,S1,S2,S3,dim) field.
    dim, factor = 4, 2
    B, S1, S2, S3 = 2, 8, 8, 7          # N = 896 tokens (not a tile multiple: exercises padding)
    H = dim * factor

    key = jax.random.PRNGKey(0)
    ks = jax.random.split(key, 6)
    x = jax.random.normal(ks[0], (B, S1, S2, S3, dim), jnp.float32)

    # nn.Linear-style parameters, weights stored pre-transposed as (in, out)
    W1 = 0.3 * jax.random.normal(ks[1], (dim, H), jnp.float32)
    b1 = 0.1 * jax.random.normal(ks[2], (H,), jnp.float32)
    W2 = 0.3 * jax.random.normal(ks[3], (H, dim), jnp.float32)
    b2 = 0.1 * jax.random.normal(ks[4], (dim,), jnp.float32)
    g = 1.0 + 0.1 * jax.random.normal(ks[5], (dim,), jnp.float32)   # LayerNorm gamma
    bt = jnp.zeros((dim,), jnp.float32)                             # LayerNorm beta
    params = (W1, b1, W2, b2, g, bt)

    out = feed_forward(x, params, layer_norm=True)
    jax.block_until_ready(out)

    ref = _ref_feed_forward(x.reshape(-1, dim), params).reshape(x.shape)
    assert out.shape == x.shape
    err = float(jnp.max(jnp.abs(out - ref)))
    assert jnp.allclose(out, ref, atol=1e-3, rtol=1e-3), f"max abs err {err}"

    print("KERNEL_OK")
</pallas_src>

<mosaic_0001>
module attributes {stable_mosaic.version = 11 : i64} {
  func.func @_ffn_kernel(%arg0: i32, %arg1: memref<32x128xf32, #tpu.memory_space<vmem>>, %arg2: memref<128x256xf32, #tpu.memory_space<vmem>>, %arg3: memref<1x256xf32, #tpu.memory_space<vmem>>, %arg4: memref<256x128xf32, #tpu.memory_space<vmem>>, %arg5: memref<1x128xf32, #tpu.memory_space<vmem>>, %arg6: memref<1x128xf32, #tpu.memory_space<vmem>>, %arg7: memref<1x128xf32, #tpu.memory_space<vmem>>, %arg8: memref<128x128xf32, #tpu.memory_space<vmem>>, %arg9: memref<32x128xf32, #tpu.memory_space<vmem>>) attributes {dimension_semantics = [#tpu.dimension_semantics<parallel>], iteration_bounds = array<i64: 1>, scalar_prefetch = 0 : i64, scratch_operands = 0 : i64, tpu.core_type = #tpu.core_type<tc>, window_params = [{transform_indices = @transform_0, window_bounds = array<i64: 32, 128>}, {pipeline_mode = #tpu.pipeline_mode<synchronous>, transform_indices = @transform_1, window_bounds = array<i64: 128, 256>}, {pipeline_mode = #tpu.pipeline_mode<synchronous>, transform_indices = @transform_2, window_bounds = array<i64: 1, 256>}, {pipeline_mode = #tpu.pipeline_mode<synchronous>, transform_indices = @transform_3, window_bounds = array<i64: 256, 128>}, {pipeline_mode = #tpu.pipeline_mode<synchronous>, transform_indices = @transform_4, window_bounds = array<i64: 1, 128>}, {pipeline_mode = #tpu.pipeline_mode<synchronous>, transform_indices = @transform_5, window_bounds = array<i64: 1, 128>}, {pipeline_mode = #tpu.pipeline_mode<synchronous>, transform_indices = @transform_6, window_bounds = array<i64: 1, 128>}, {pipeline_mode = #tpu.pipeline_mode<synchronous>, transform_indices = @transform_7, window_bounds = array<i64: 128, 128>}, {transform_indices = @transform_8, window_bounds = array<i64: 32, 128>}]} {
    %c0 = arith.constant 0 : index
    %c0_0 = arith.constant 0 : index
    %0 = vector.load %arg1[%c0, %c0_0] : memref<32x128xf32, #tpu.memory_space<vmem>>, vector<32x128xf32>
    %c0_1 = arith.constant 0 : index
    %c0_2 = arith.constant 0 : index
    %1 = vector.load %arg2[%c0_1, %c0_2] : memref<128x256xf32, #tpu.memory_space<vmem>>, vector<128x256xf32>
    %cst = arith.constant dense<0.000000e+00> : vector<32x256xf32>
    %2 = tpu.matmul %0, %1, %cst {dimension_numbers = #tpu.dot_dimension_numbers<[1], [0], [0], [1], [0, 0, 1, 1], [], []>} : vector<32x128xf32>, vector<128x256xf32>, vector<32x256xf32> -> vector<32x256xf32>
    %c0_3 = arith.constant 0 : index
    %c0_4 = arith.constant 0 : index
    %3 = vector.load %arg3[%c0_3, %c0_4] : memref<1x256xf32, #tpu.memory_space<vmem>>, vector<1x256xf32>
    %4 = vector.broadcast %3 : vector<1x256xf32> to vector<32x256xf32>
    %5 = arith.addf %2, %4 : vector<32x256xf32>
    %cst_5 = arith.constant 0.000000e+00 : f32
    %6 = vector.broadcast %cst_5 : f32 to vector<32x256xf32>
    %7 = arith.maximumf %5, %6 : vector<32x256xf32>
    %c0_6 = arith.constant 0 : index
    %c0_7 = arith.constant 0 : index
    %8 = vector.load %arg4[%c0_6, %c0_7] : memref<256x128xf32, #tpu.memory_space<vmem>>, vector<256x128xf32>
    %cst_8 = arith.constant dense<0.000000e+00> : vector<32x128xf32>
    %9 = tpu.matmul %7, %8, %cst_8 {dimension_numbers = #tpu.dot_dimension_numbers<[1], [0], [0], [1], [0, 0, 1, 1], [], []>} : vector<32x256xf32>, vector<256x128xf32>, vector<32x128xf32> -> vector<32x128xf32>
    %c0_9 = arith.constant 0 : index
    %c0_10 = arith.constant 0 : index
    %10 = vector.load %arg5[%c0_9, %c0_10] : memref<1x128xf32, #tpu.memory_space<vmem>>, vector<1x128xf32>
    %11 = vector.broadcast %10 : vector<1x128xf32> to vector<32x128xf32>
    %12 = arith.addf %9, %11 : vector<32x128xf32>
    %c0_11 = arith.constant 0 : index
    %c0_12 = arith.constant 0 : index
    %13 = vector.load %arg8[%c0_11, %c0_12] : memref<128x128xf32, #tpu.memory_space<vmem>>, vector<128x128xf32>
    %cst_13 = arith.constant dense<0.000000e+00> : vector<32x128xf32>
    %14 = tpu.matmul %12, %13, %cst_13 {dimension_numbers = #tpu.dot_dimension_numbers<[1], [0], [0], [1], [0, 0, 1, 1], [], []>} : vector<32x128xf32>, vector<128x128xf32>, vector<32x128xf32> -> vector<32x128xf32>
    %15 = arith.mulf %12, %12 : vector<32x128xf32>
    %c0_14 = arith.constant 0 : index
    %c0_15 = arith.constant 0 : index
    %16 = vector.load %arg8[%c0_14, %c0_15] : memref<128x128xf32, #tpu.memory_space<vmem>>, vector<128x128xf32>
    %cst_16 = arith.constant dense<0.000000e+00> : vector<32x128xf32>
    %17 = tpu.matmul %15, %16, %cst_16 {dimension_numbers = #tpu.dot_dimension_numbers<[1], [0], [0], [1], [0, 0, 1, 1], [], []>} : vector<32x128xf32>, vector<128x128xf32>, vector<32x128xf32> -> vector<32x128xf32>
    %18 = arith.mulf %14, %14 : vector<32x128xf32>
    %19 = arith.subf %17, %18 : vector<32x128xf32>
    %cst_17 = arith.constant 9.99999974E-6 : f32
    %20 = vector.broadcast %cst_17 : f32 to vector<32x128xf32>
    %21 = arith.addf %19, %20 : vector<32x128xf32>
    %22 = math.rsqrt %21 : vector<32x128xf32>
    %23 = arith.subf %12, %14 : vector<32x128xf32>
    %c0_18 = arith.constant 0 : index
    %c0_19 = arith.constant 0 : index
    %24 = vector.load %arg6[%c0_18, %c0_19] : memref<1x128xf32, #tpu.memory_space<vmem>>, vector<1x128xf32>
    %25 = vector.broadcast %24 : vector<1x128xf32> to vector<32x128xf32>
    %26 = arith.mulf %22, %25 : vector<32x128xf32>
    %27 = arith.mulf %23, %26 : vector<32x128xf32>
    %c0_20 = arith.constant 0 : index
    %c0_21 = arith.constant 0 : index
    %28 = vector.load %arg7[%c0_20, %c0_21] : memref<1x128xf32, #tpu.memory_space<vmem>>, vector<1x128xf32>
    %29 = vector.broadcast %28 : vector<1x128xf32> to vector<32x128xf32>
    %30 = arith.addf %27, %29 : vector<32x128xf32>
    %c0_22 = arith.constant 0 : index
    %c0_23 = arith.constant 0 : index
    %31 = vector.load %arg9[%c0_22, %c0_23] : memref<32x128xf32, #tpu.memory_space<vmem>>, vector<32x128xf32>
    tpu.vector_store %arg9[%c0_22, %c0_23], %30 {strides = array<i32>} : memref<32x128xf32, #tpu.memory_space<vmem>>, vector<32x128xf32>,
    return
  }
  func.func @transform_0(%arg0: i32) -> (i32, i32) {
    %c0_i32 = arith.constant 0 : i32
    %c0_i32_0 = arith.constant 0 : i32
    return %arg0, %c0_i32 : i32, i32
  }
  func.func @transform_1(%arg0: i32) -> (i32, i32) {
    %c0_i32 = arith.constant 0 : i32
    %c0_i32_0 = arith.constant 0 : i32
    %c0_i32_1 = arith.constant 0 : i32
    return %c0_i32, %c0_i32_0 : i32, i32
  }
  func.func @transform_2(%arg0: i32) -> (i32, i32) {
    %c0_i32 = arith.constant 0 : i32
    %c0_i32_0 = arith.constant 0 : i32
    %c0_i32_1 = arith.constant 0 : i32
    return %c0_i32, %c0_i32_0 : i32, i32
  }
  func.func @transform_3(%arg0: i32) -> (i32, i32) {
    %c0_i32 = arith.constant 0 : i32
    %c0_i32_0 = arith.constant 0 : i32
    %c0_i32_1 = arith.constant 0 : i32
    return %c0_i32, %c0_i32_0 : i32, i32
  }
  func.func @transform_4(%arg0: i32) -> (i32, i32) {
    %c0_i32 = arith.constant 0 : i32
    %c0_i32_0 = arith.constant 0 : i32
    %c0_i32_1 = arith.constant 0 : i32
    return %c0_i32, %c0_i32_0 : i32, i32
  }
  func.func @transform_5(%arg0: i32) -> (i32, i32) {
    %c0_i32 = arith.constant 0 : i32
    %c0_i32_0 = arith.constant 0 : i32
    %c0_i32_1 = arith.constant 0 : i32
    return %c0_i32, %c0_i32_0 : i32, i32
  }
  func.func @transform_6(%arg0: i32) -> (i32, i32) {
    %c0_i32 = arith.constant 0 : i32
    %c0_i32_0 = arith.constant 0 : i32
    %c0_i32_1 = arith.constant 0 : i32
    return %c0_i32, %c0_i32_0 : i32, i32
  }
  func.func @transform_7(%arg0: i32) -> (i32, i32) {
    %c0_i32 = arith.constant 0 : i32
    %c0_i32_0 = arith.constant 0 : i32
    %c0_i32_1 = arith.constant 0 : i32
    return %c0_i32, %c0_i32_0 : i32, i32
  }
  func.func @transform_8(%arg0: i32) -> (i32, i32) {
    %c0_i32 = arith.constant 0 : i32
    %c0_i32_0 = arith.constant 0 : i32
    return %arg0, %c0_i32 : i32, i32
  }
}

</mosaic_0001>

<llo_original>
// kernel: tpu_custom_call.1
$region0: #{tpu_custom_call.1}
  #allocation0 [shape = 'u32[]', space=smem, size = 0x4, offset = 0x4, fixed_abs, tag = 'smem constant byte address 0x4 - core index']
  #allocation1 [shape = 'u32[144,128]{1,0:T(1,128)}', space=vmem, size = 0x12000, scoped, tag = 'internal scratch']
  %s0 = inlined_call_operand.hbm [shape: f32[32,128], index: 0, kind: input, shape index: {}]
  %s1 = inlined_call_operand.hbm [shape: f32[128,256], index: 1, kind: input, shape index: {}]
  %s2 = inlined_call_operand.vmem [shape: f32[1,256], index: 2, kind: input, shape index: {}]
  %s3 = inlined_call_operand.hbm [shape: f32[256,128], index: 3, kind: input, shape index: {}]
  %s4 = inlined_call_operand.vmem [shape: f32[1,128], index: 4, kind: input, shape index: {}]
  %s5 = inlined_call_operand.vmem [shape: f32[1,128], index: 5, kind: input, shape index: {}]
  %s6 = inlined_call_operand.vmem [shape: f32[1,128], index: 6, kind: input, shape index: {}]
  %s7 = inlined_call_operand.hbm [shape: f32[128,128], index: 7, kind: input, shape index: {}]
  %s8 = inlined_call_operand.hbm [shape: f32[32,128], index: 8, kind: output, shape index: {}]
  %s9 = sld [smem:[#allocation0]]
  $region58: #{tpu_custom_call.1} parent=0
    _
  %s11 = ssub.s32 1, %s9
  %s12 = scalar_select 0, %s11, %s9
  $region1: #{tpu_custom_call.1} parent=0
    #allocation2 [shape = 'u8[16384]{0}', space=vmem, size = 0x4000, scoped, tag = 'input window, operand 0, single buffered']
    #allocation3 [shape = 's32[1]{0}', space=sflag, size = 0x4, scoped, tag = 'scoped memory for tpu_custom_call.1']
    #allocation4 [shape = 's32[1]{0}', space=sflag, size = 0x4, scoped, tag = 'scoped memory for tpu_custom_call.1']
    #allocation5 [shape = 'u8[131072]{0}', space=vmem, size = 0x20000, scoped, tag = 'input window, operand 1, single buffered']
    #allocation6 [shape = 's32[1]{0}', space=sflag, size = 0x4, scoped, tag = 'scoped memory for tpu_custom_call.1']
    #allocation7 [shape = 'u8[131072]{0}', space=vmem, size = 0x20000, scoped, tag = 'input window, operand 3, single buffered']
    #allocation8 [shape = 'u8[65536]{0}', space=vmem, size = 0x10000, scoped, tag = 'input window, operand 7, single buffered']
    #allocation9 [shape = 's32[1]{0}', space=sflag, size = 0x4, scoped, tag = 'scoped memory for tpu_custom_call.1']
    #allocation10 [shape = 'u8[16384]{0}', space=vmem, size = 0x4000, scoped, tag = 'output window, operand 0, single buffered']
    %13 = vsyncpa [#allocation3], 0
    %14 = vsyncpa [#allocation6], 0
    %15 = vsyncpa [#allocation9], 0
    %16 = vsyncpa [#allocation4], 0
    // Predicated region
    $region2: #{tpu_custom_call.1} parent=1 // pred_check
      _
    $region3: #{tpu_custom_call.1} parent=1 // pred_check_branch
      %18 = sbr.rel (0) target = $region5
    $region4: #{tpu_custom_call.1} parent=1 // pred_region
      %s20 = ssub.s32 512, 512
      %21 = vsyncadd [#allocation3], %s20
      %s22 = sshll.u32 [#allocation2], 4
      %s23 = int_to_ptr.vmem [resolvable:$true] %s22
      %28 = dma.hbm_to_vmem [thread:$0]  %s0, 512, %s23, [#allocation3], 128, 128, 8
    $region5: #{tpu_custom_call.1} parent=1 // pred_fallthru
      _
    // Predicated region
    $region6: #{tpu_custom_call.1} parent=1 // pred_check
      _
    $region7: #{tpu_custom_call.1} parent=1 // pred_check_branch
      %30 = sbr.rel (0) target = $region9
    $region8: #{tpu_custom_call.1} parent=1 // pred_region
      %s32 = ssub.s32 4096, 4096
      %33 = vsyncadd [#allocation6], %s32
      %s34 = sshll.u32 [#allocation5], 4
      %s35 = int_to_ptr.vmem [resolvable:$true] %s34
      %40 = dma.hbm_to_vmem [thread:$0]  %s1, 4096, %s35, [#allocation6], 256, 256, 16
    $region9: #{tpu_custom_call.1} parent=1 // pred_fallthru
      _
    // Predicated region
    $region10: #{tpu_custom_call.1} parent=1 // pred_check
      _
    $region11: #{tpu_custom_call.1} parent=1 // pred_check_branch
      %42 = sbr.rel (0) target = $region13
    $region12: #{tpu_custom_call.1} parent=1 // pred_region
      _
    $region13: #{tpu_custom_call.1} parent=1 // pred_fallthru
      _
    // Predicated region
    $region14: #{tpu_custom_call.1} parent=1 // pred_check
      _
    $region15: #{tpu_custom_call.1} parent=1 // pred_check_branch
      %44 = sbr.rel (0) target = $region17
    $region16: #{tpu_custom_call.1} parent=1 // pred_region
      %s46 = ssub.s32 4096, 4096
      %47 = vsyncadd [#allocation6], %s46
      %s48 = sshll.u32 [#allocation7], 4
      %s49 = int_to_ptr.vmem [resolvable:$true] %s48
      %54 = dma.hbm_to_vmem [thread:$0]  %s3, 4096, %s49, [#allocation6], 128, 128, 8
    $region17: #{tpu_custom_call.1} parent=1 // pred_fallthru
      _
    // Predicated region
    $region18: #{tpu_custom_call.1} parent=1 // pred_check
      _
    $region19: #{tpu_custom_call.1} parent=1 // pred_check_branch
      %56 = sbr.rel (0) target = $region21
    $region20: #{tpu_custom_call.1} parent=1 // pred_region
      _
    $region21: #{tpu_custom_call.1} parent=1 // pred_fallthru
      _
    // Predicated region
    $region22: #{tpu_custom_call.1} parent=1 // pred_check
      _
    $region23: #{tpu_custom_call.1} parent=1 // pred_check_branch
      %58 = sbr.rel (0) target = $region25
    $region24: #{tpu_custom_call.1} parent=1 // pred_region
      _
    $region25: #{tpu_custom_call.1} parent=1 // pred_fallthru
      _
    // Predicated region
    $region26: #{tpu_custom_call.1} parent=1 // pred_check
      _
    $region27: #{tpu_custom_call.1} parent=1 // pred_check_branch
      %60 = sbr.rel (0) target = $region29
    $region28: #{tpu_custom_call.1} parent=1 // pred_region
      _
    $region29: #{tpu_custom_call.1} parent=1 // pred_fallthru
      _
    // Predicated region
    $region30: #{tpu_custom_call.1} parent=1 // pred_check
      _
    $region31: #{tpu_custom_call.1} parent=1 // pred_check_branch
      %62 = sbr.rel (0) target = $region33
    $region32: #{tpu_custom_call.1} parent=1 // pred_region
      %s64 = ssub.s32 2048, 2048
      %65 = vsyncadd [#allocation9], %s64
      %s66 = sshll.u32 [#allocation8], 4
      %s67 = int_to_ptr.vmem [resolvable:$true] %s66
      %72 = dma.hbm_to_vmem [thread:$0]  %s7, 2048, %s67, [#allocation9], 128, 128, 8
    $region33: #{tpu_custom_call.1} parent=1 // pred_fallthru
      _
    // Predicated region
    $region34: #{tpu_custom_call.1} parent=1 // pred_check
      _
    $region35: #{tpu_custom_call.1} parent=1 // pred_check_branch
      %74 = sbr.rel (0) target = $region37
    $region36: #{tpu_custom_call.1} parent=1 // pred_region
      %75 = dma.done [#allocation3], 512
    $region37: #{tpu_custom_call.1} parent=1 // pred_fallthru
      _
    // Predicated region
    $region38: #{tpu_custom_call.1} parent=1 // pred_check
      _
    $region39: #{tpu_custom_call.1} parent=1 // pred_check_branch
      %77 = sbr.rel (0) target = $region41
    $region40: #{tpu_custom_call.1} parent=1 // pred_region
      %78 = dma.done [#allocation6], 4096
    $region41: #{tpu_custom_call.1} parent=1 // pred_fallthru
      _
    // Predicated region
    $region42: #{tpu_custom_call.1} parent=1 // pred_check
      _
    $region43: #{tpu_custom_call.1} parent=1 // pred_check_branch
      %80 = sbr.rel (0) target = $region45
    $region44: #{tpu_custom_call.1} parent=1 // pred_region
      %81 = dma.done [#allocation6], 4096
    $region45: #{tpu_custom_call.1} parent=1 // pred_fallthru
      _
    // Predicated region
    $region46: #{tpu_custom_call.1} parent=1 // pred_check
      _
    $region47: #{tpu_custom_call.1} parent=1 // pred_check_branch
      %83 = sbr.rel (0) target = $region49
    $region48: #{tpu_custom_call.1} parent=1 // pred_region
      %84 = dma.done [#allocation9], 2048
    $region49: #{tpu_custom_call.1} parent=1 // pred_fallthru
      _
    %v85 = vld [vmem:[#allocation2] sm:$0xff]
    %v86 = vld [vmem:[#allocation2 + $0x8] sm:$0xff]
    %v87 = vld [vmem:[#allocation2 + $0x10] sm:$0xff]
    %v88 = vld [vmem:[#allocation2 + $0x18] sm:$0xff]
    %v89 = vld [vmem:[#allocation5] sm:$0xff]
    %v90 = vld [vmem:[#allocation5 + $0x8] sm:$0xff]
    %v91 = vld [vmem:[#allocation5 + $0x10] sm:$0xff]
    %v92 = vld [vmem:[#allocation5 + $0x18] sm:$0xff]
    %v93 = vld [vmem:[#allocation5 + $0x20] sm:$0xff]
    %v94 = vld [vmem:[#allocation5 + $0x28] sm:$0xff]
    %v95 = vld [vmem:[#allocation5 + $0x30] sm:$0xff]
    %v96 = vld [vmem:[#allocation5 + $0x38] sm:$0xff]
    %v97 = vld [vmem:[#allocation5 + $0x40] sm:$0xff]
    %v98 = vld [vmem:[#allocation5 + $0x48] sm:$0xff]
    %v99 = vld [vmem:[#allocation5 + $0x50] sm:$0xff]
    %v100 = vld [vmem:[#allocation5 + $0x58] sm:$0xff]
    %v101 = vld [vmem:[#allocation5 + $0x60] sm:$0xff]
    %v102 = vld [vmem:[#allocation5 + $0x68] sm:$0xff]
    %v103 = vld [vmem:[#allocation5 + $0x70] sm:$0xff]
    %v104 = vld [vmem:[#allocation5 + $0x78] sm:$0xff]
    %v105 = vld [vmem:[#allocation5 + $0x80] sm:$0xff]
    %v106 = vld [vmem:[#allocation5 + $0x88] sm:$0xff]
    %v107 = vld [vmem:[#allocation5 + $0x90] sm:$0xff]
    %v108 = vld [vmem:[#allocation5 + $0x98] sm:$0xff]
    %v109 = vld [vmem:[#allocation5 + $0xa0] sm:$0xff]
    %v110 = vld [vmem:[#allocation5 + $0xa8] sm:$0xff]
    %v111 = vld [vmem:[#allocation5 + $0xb0] sm:$0xff]
    %v112 = vld [vmem:[#allocation5 + $0xb8] sm:$0xff]
    %v113 = vld [vmem:[#allocation5 + $0xc0] sm:$0xff]
    %v114 = vld [vmem:[#allocation5 + $0xc8] sm:$0xff]
    %v115 = vld [vmem:[#allocation5 + $0xd0] sm:$0xff]
    %v116 = vld [vmem:[#allocation5 + $0xd8] sm:$0xff]
    %v117 = vld [vmem:[#allocation5 + $0xe0] sm:$0xff]
    %v118 = vld [vmem:[#allocation5 + $0xe8] sm:$0xff]
    %v119 = vld [vmem:[#allocation5 + $0xf0] sm:$0xff]
    %v120 = vld [vmem:[#allocation5 + $0xf8] sm:$0xff]
    %v121 = vld [vmem:[%s2] sm:$0x3]
    %v123 = vlaneseq
    %v124 = vshrl.u32 %v123, 7
    %v125 = vsub.s32 0, %v124
    %v126 = vrot.slane %v121, %v125
    %v127 = vlaneseq
    %v128 = vshrl.u32 %v127, 7
    %v129 = vsub.s32 1, %v128
    %v130 = vrot.slane %v121, %v129
    %133 = vmatprep.subr.mxu0 %v90
    %134 = vmatpush1.msra.mxu0 %v89
    %135 = vmatprep.subr.mxu0 %v92
    %136 = vmatpush1.msra.mxu0 %v91
    %137 = vmatprep.subr.mxu0 %v94
    %138 = vmatpush1.msra.mxu0 %v93
    %139 = vmatprep.subr.mxu0 %v96
    %140 = vmatpush1.msra.mxu0 %v95
    %141 = vmatprep.subr.mxu0 %v98
    %142 = vmatpush1.msra.mxu0 %v97
    %143 = vmatprep.subr.mxu0 %v100
    %144 = vmatpush1.msra.mxu0 %v99
    %145 = vmatprep.subr.mxu0 %v102
    %146 = vmatpush1.msra.mxu0 %v101
    %147 = vmatprep.subr.mxu0 %v104
    %148 = vmatpush1.msra.mxu0 %v103
    %149 = vmatprep.subr.mxu0 %v106
    %150 = vmatpush1.msra.mxu0 %v105
    %151 = vmatprep.subr.mxu0 %v108
    %152 = vmatpush1.msra.mxu0 %v107
    %153 = vmatprep.subr.mxu0 %v110
    %154 = vmatpush1.msra.mxu0 %v109
    %155 = vmatprep.subr.mxu0 %v112
    %156 = vmatpush1.msra.mxu0 %v111
    %157 = vmatprep.subr.mxu0 %v114
    %158 = vmatpush1.msra.mxu0 %v113
    %159 = vmatprep.subr.mxu0 %v116
    %160 = vmatpush1.msra.mxu0 %v115
    %161 = vmatprep.subr.mxu0 %v118
    %162 = vmatpush1.msra.mxu0 %v117
    %163 = vmatprep.subr.mxu0 %v120
    %164 = vmatpush1.msra.mxu0 %v119
    %165 = vmatprep.subr.mxu0 0.0
    %166 = vmatpush1.msra.mxu0 0.0
    %167 = vmatprep.subr.mxu0 0.0
    %168 = vmatpush1.msra.mxu0 0.0
    %169 = vmatprep.subr.mxu0 0.0
    %170 = vmatpush1.msra.mxu0 0.0
    %171 = vmatprep.subr.mxu0 0.0
    %172 = vmatpush1.msra.mxu0 0.0
    %173 = vmatprep.subr.mxu0 0.0
    %174 = vmatpush1.msra.mxu0 0.0
    %175 = vmatprep.subr.mxu0 0.0
    %176 = vmatpush1.msra.mxu0 0.0
    %177 = vmatprep.subr.mxu0 0.0
    %178 = vmatpush1.msra.mxu0 0.0
    %179 = vmatprep.subr.mxu0 0.0
    %180 = vmatpush1.msra.mxu0 0.0
    %181 = vmatprep.subr.mxu0 0.0
    %182 = vmatpush1.msra.mxu0 0.0
    %183 = vmatprep.subr.mxu0 0.0
    %184 = vmatpush1.msra.mxu0 0.0
    %185 = vmatprep.subr.mxu0 0.0
    %186 = vmatpush1.msra.mxu0 0.0
    %187 = vmatprep.subr.mxu0 0.0
    %188 = vmatpush1.msra.mxu0 0.0
    %189 = vmatprep.subr.mxu0 0.0
    %190 = vmatpush1.msra.mxu0 0.0
    %191 = vmatprep.subr.mxu0 0.0
    %192 = vmatpush1.msra.mxu0 0.0
    %193 = vmatprep.subr.mxu0 0.0
    %194 = vmatpush1.msra.mxu0 0.0
    %195 = vmatprep.subr.mxu0 0.0
    %196 = vmatpush1.msra.mxu0 0.0
    %197 = vmatprep.mubr.f32.mxu0 0.0
    %198 = vmatmul.mubr.f32.gmra.mrb[0].mxu0 %v85
    %v199 = vpop.f32.mrb[0].mxu0
    %v200 = vadd.f32 %v126, %v199
    %v201 = vpop.f32.mrb[0].mxu0
    %v202 = vadd.f32 %v130, %v201
    %203 = vmatprep.mubr.f32.mxu0 0.0
    %204 = vmatmul.mubr.f32.gmra.mrb[0].mxu0 %v86
    %v205 = vpop.f32.mrb[0].mxu0
    %v206 = vadd.f32 %v126, %v205
    %v207 = vpop.f32.mrb[0].mxu0
    %v208 = vadd.f32 %v130, %v207
    %209 = vmatprep.mubr.f32.mxu0 0.0
    %210 = vmatmul.mubr.f32.gmra.mrb[0].mxu0 %v87
    %v211 = vpop.f32.mrb[0].mxu0
    %v212 = vadd.f32 %v126, %v211
    %v213 = vpop.f32.mrb[0].mxu0
    %v214 = vadd.f32 %v130, %v213
    %215 = vmatprep.mubr.f32.mxu0 0.0
    %216 = vmatmul.mubr.f32.gmra.mrb[0].mxu0 %v88
    %v217 = vpop.f32.mrb[0].mxu0
    %v218 = vadd.f32 %v126, %v217
    %v219 = vpop.f32.mrb[0].mxu0
    %v220 = vadd.f32 %v130, %v219
    %221 = vdwg.mxu0
    %v222 = vmax.f32 %v200, 0.0
    %v223 = vmax.f32 %v202, 0.0
    %v224 = vmax.f32 %v206, 0.0
    %v225 = vmax.f32 %v208, 0.0
    %v226 = vmax.f32 %v212, 0.0
    %v227 = vmax.f32 %v214, 0.0
    %v228 = vmax.f32 %v218, 0.0
    %v229 = vmax.f32 %v220, 0.0
    %v230 = vld [vmem:[#allocation7] sm:$0xff]
    %v231 = vld [vmem:[#allocation7 + $0x8] sm:$0xff]
    %v232 = vld [vmem:[#allocation7 + $0x10] sm:$0xff]
    %v233 = vld [vmem:[#allocation7 + $0x18] sm:$0xff]
    %v234 = vld [vmem:[#allocation7 + $0x20] sm:$0xff]
    %v235 = vld [vmem:[#allocation7 + $0x28] sm:$0xff]
    %v236 = vld [vmem:[#allocation7 + $0x30] sm:$0xff]
    %v237 = vld [vmem:[#allocation7 + $0x38] sm:$0xff]
    %v238 = vld [vmem:[#allocation7 + $0x40] sm:$0xff]
    %v239 = vld [vmem:[#allocation7 + $0x48] sm:$0xff]
    %v240 = vld [vmem:[#allocation7 + $0x50] sm:$0xff]
    %v241 = vld [vmem:[#allocation7 + $0x58] sm:$0xff]
    %v242 = vld [vmem:[#allocation7 + $0x60] sm:$0xff]
    %v243 = vld [vmem:[#allocation7 + $0x68] sm:$0xff]
    %v244 = vld [vmem:[#allocation7 + $0x70] sm:$0xff]
    %v245 = vld [vmem:[#allocation7 + $0x78] sm:$0xff]
    %v246 = vld [vmem:[#allocation7 + $0x80] sm:$0xff]
    %v247 = vld [vmem:[#allocation7 + $0x88] sm:$0xff]
    %v248 = vld [vmem:[#allocation7 + $0x90] sm:$0xff]
    %v249 = vld [vmem:[#allocation7 + $0x98] sm:$0xff]
    %v250 = vld [vmem:[#allocation7 + $0xa0] sm:$0xff]
    %v251 = vld [vmem:[#allocation7 + $0xa8] sm:$0xff]
    %v252 = vld [vmem:[#allocation7 + $0xb0] sm:$0xff]
    %v253 = vld [vmem:[#allocation7 + $0xb8] sm:$0xff]
    %v254 = vld [vmem:[#allocation7 + $0xc0] sm:$0xff]
    %v255 = vld [vmem:[#allocation7 + $0xc8] sm:$0xff]
    %v256 = vld [vmem:[#allocation7 + $0xd0] sm:$0xff]
    %v257 = vld [vmem:[#allocation7 + $0xd8] sm:$0xff]
    %v258 = vld [vmem:[#allocation7 + $0xe0] sm:$0xff]
    %v259 = vld [vmem:[#allocation7 + $0xe8] sm:$0xff]
    %v260 = vld [vmem:[#allocation7 + $0xf0] sm:$0xff]
    %v261 = vld [vmem:[#allocation7 + $0xf8] sm:$0xff]
    %v262 = vld [vmem:[%s4] sm:$0x1]
    %v264 = vlaneseq
    %v265 = vshrl.u32 %v264, 7
    %v266 = vsub.s32 0, %v265
    %v267 = vrot.slane %v262, %v266
    %269 = vmatprep.subr.mxu0 0.0
    %270 = vmatpush1.msra.mxu0 %v230
    %271 = vmatprep.subr.mxu0 0.0
    %272 = vmatpush1.msra.mxu0 %v231
    %273 = vmatprep.subr.mxu0 0.0
    %274 = vmatpush1.msra.mxu0 %v232
    %275 = vmatprep.subr.mxu0 0.0
    %276 = vmatpush1.msra.mxu0 %v233
    %277 = vmatprep.subr.mxu0 0.0
    %278 = vmatpush1.msra.mxu0 %v234
    %279 = vmatprep.subr.mxu0 0.0
    %280 = vmatpush1.msra.mxu0 %v235
    %281 = vmatprep.subr.mxu0 0.0
    %282 = vmatpush1.msra.mxu0 %v236
    %283 = vmatprep.subr.mxu0 0.0
    %284 = vmatpush1.msra.mxu0 %v237
    %285 = vmatprep.subr.mxu0 0.0
    %286 = vmatpush1.msra.mxu0 %v238
    %287 = vmatprep.subr.mxu0 0.0
    %288 = vmatpush1.msra.mxu0 %v239
    %289 = vmatprep.subr.mxu0 0.0
    %290 = vmatpush1.msra.mxu0 %v240
    %291 = vmatprep.subr.mxu0 0.0
    %292 = vmatpush1.msra.mxu0 %v241
    %293 = vmatprep.subr.mxu0 0.0
    %294 = vmatpush1.msra.mxu0 %v242
    %295 = vmatprep.subr.mxu0 0.0
    %296 = vmatpush1.msra.mxu0 %v243
    %297 = vmatprep.subr.mxu0 0.0
    %298 = vmatpush1.msra.mxu0 %v244
    %299 = vmatprep.subr.mxu0 0.0
    %300 = vmatpush1.msra.mxu0 %v245
    %301 = vmatprep.subr.mxu0 0.0
    %302 = vmatpush1.msra.mxu0 %v246
    %303 = vmatprep.subr.mxu0 0.0
    %304 = vmatpush1.msra.mxu0 %v247
    %305 = vmatprep.subr.mxu0 0.0
    %306 = vmatpush1.msra.mxu0 %v248
    %307 = vmatprep.subr.mxu0 0.0
    %308 = vmatpush1.msra.mxu0 %v249
    %309 = vmatprep.subr.mxu0 0.0
    %310 = vmatpush1.msra.mxu0 %v250
    %311 = vmatprep.subr.mxu0 0.0
    %312 = vmatpush1.msra.mxu0 %v251
    %313 = vmatprep.subr.mxu0 0.0
    %314 = vmatpush1.msra.mxu0 %v252
    %315 = vmatprep.subr.mxu0 0.0
    %316 = vmatpush1.msra.mxu0 %v253
    %317 = vmatprep.subr.mxu0 0.0
    %318 = vmatpush1.msra.mxu0 %v254
    %319 = vmatprep.subr.mxu0 0.0
    %320 = vmatpush1.msra.mxu0 %v255
    %321 = vmatprep.subr.mxu0 0.0
    %322 = vmatpush1.msra.mxu0 %v256
    %323 = vmatprep.subr.mxu0 0.0
    %324 = vmatpush1.msra.mxu0 %v257
    %325 = vmatprep.subr.mxu0 0.0
    %326 = vmatpush1.msra.mxu0 %v258
    %327 = vmatprep.subr.mxu0 0.0
    %328 = vmatpush1.msra.mxu0 %v259
    %329 = vmatprep.subr.mxu0 0.0
    %330 = vmatpush1.msra.mxu0 %v260
    %331 = vmatprep.subr.mxu0 0.0
    %332 = vmatpush1.msra.mxu0 %v261
    %333 = vmatprep.mubr.f32.mxu0 %v223
    %334 = vmatmul.mubr.f32.gmra.mrb[0].mxu0 %v222
    %v335 = vpop.f32.mrb[0].mxu0
    %v336 = vadd.f32 %v267, %v335
    %v337 = vpop.f32.mrb[0].mxu0
    %338 = vmatprep.mubr.f32.mxu0 %v225
    %339 = vmatmul.mubr.f32.gmra.mrb[0].mxu0 %v224
    %v340 = vpop.f32.mrb[0].mxu0
    %v341 = vadd.f32 %v267, %v340
    %v342 = vpop.f32.mrb[0].mxu0
    %343 = vmatprep.mubr.f32.mxu0 %v227
    %344 = vmatmul.mubr.f32.gmra.mrb[0].mxu0 %v226
    %v345 = vpop.f32.mrb[0].mxu0
    %v346 = vadd.f32 %v267, %v345
    %v347 = vpop.f32.mrb[0].mxu0
    %348 = vmatprep.mubr.f32.mxu0 %v229
    %349 = vmatmul.mubr.f32.gmra.mrb[0].mxu0 %v228
    %v350 = vpop.f32.mrb[0].mxu0
    %v351 = vadd.f32 %v267, %v350
    %v352 = vpop.f32.mrb[0].mxu0
    %353 = vdwg.mxu0
    %v354 = vld [vmem:[#allocation8] sm:$0xff]
    %v355 = vld [vmem:[#allocation8 + $0x8] sm:$0xff]
    %v356 = vld [vmem:[#allocation8 + $0x10] sm:$0xff]
    %v357 = vld [vmem:[#allocation8 + $0x18] sm:$0xff]
    %v358 = vld [vmem:[#allocation8 + $0x20] sm:$0xff]
    %v359 = vld [vmem:[#allocation8 + $0x28] sm:$0xff]
    %v360 = vld [vmem:[#allocation8 + $0x30] sm:$0xff]
    %v361 = vld [vmem:[#allocation8 + $0x38] sm:$0xff]
    %v362 = vld [vmem:[#allocation8 + $0x40] sm:$0xff]
    %v363 = vld [vmem:[#allocation8 + $0x48] sm:$0xff]
    %v364 = vld [vmem:[#allocation8 + $0x50] sm:$0xff]
    %v365 = vld [vmem:[#allocation8 + $0x58] sm:$0xff]
    %v366 = vld [vmem:[#allocation8 + $0x60] sm:$0xff]
    %v367 = vld [vmem:[#allocation8 + $0x68] sm:$0xff]
    %v368 = vld [vmem:[#allocation8 + $0x70] sm:$0xff]
    %v369 = vld [vmem:[#allocation8 + $0x78] sm:$0xff]
    %370 = vmatprep.subr.mxu0 0.0
    %371 = vmatpush1.msra.mxu0 %v354
    %372 = vmatprep.subr.mxu0 0.0
    %373 = vmatpush1.msra.mxu0 %v355
    %374 = vmatprep.subr.mxu0 0.0
    %375 = vmatpush1.msra.mxu0 %v356
    %376 = vmatprep.subr.mxu0 0.0
    %377 = vmatpush1.msra.mxu0 %v357
    %378 = vmatprep.subr.mxu0 0.0
    %379 = vmatpush1.msra.mxu0 %v358
    %380 = vmatprep.subr.mxu0 0.0
    %381 = vmatpush1.msra.mxu0 %v359
    %382 = vmatprep.subr.mxu0 0.0
    %383 = vmatpush1.msra.mxu0 %v360
    %384 = vmatprep.subr.mxu0 0.0
    %385 = vmatpush1.msra.mxu0 %v361
    %386 = vmatprep.subr.mxu0 0.0
    %387 = vmatpush1.msra.mxu0 %v362
    %388 = vmatprep.subr.mxu0 0.0
    %389 = vmatpush1.msra.mxu0 %v363
    %390 = vmatprep.subr.mxu0 0.0
    %391 = vmatpush1.msra.mxu0 %v364
    %392 = vmatprep.subr.mxu0 0.0
    %393 = vmatpush1.msra.mxu0 %v365
    %394 = vmatprep.subr.mxu0 0.0
    %395 = vmatpush1.msra.mxu0 %v366
    %396 = vmatprep.subr.mxu0 0.0
    %397 = vmatpush1.msra.mxu0 %v367
    %398 = vmatprep.subr.mxu0 0.0
    %399 = vmatpush1.msra.mxu0 %v368
    %400 = vmatprep.subr.mxu0 0.0
    %401 = vmatpush1.msra.mxu0 %v369
    %402 = vmatprep.subr.mxu0 0.0
    %403 = vmatpush1.msra.mxu0 0.0
    %404 = vmatprep.subr.mxu0 0.0
    %405 = vmatpush1.msra.mxu0 0.0
    %406 = vmatprep.subr.mxu0 0.0
    %407 = vmatpush1.msra.mxu0 0.0
    %408 = vmatprep.subr.mxu0 0.0
    %409 = vmatpush1.msra.mxu0 0.0
    %410 = vmatprep.subr.mxu0 0.0
    %411 = vmatpush1.msra.mxu0 0.0
    %412 = vmatprep.subr.mxu0 0.0
    %413 = vmatpush1.msra.mxu0 0.0
    %414 = vmatprep.subr.mxu0 0.0
    %415 = vmatpush1.msra.mxu0 0.0
    %416 = vmatprep.subr.mxu0 0.0
    %417 = vmatpush1.msra.mxu0 0.0
    %418 = vmatprep.subr.mxu0 0.0
    %419 = vmatpush1.msra.mxu0 0.0
    %420 = vmatprep.subr.mxu0 0.0
    %421 = vmatpush1.msra.mxu0 0.0
    %422 = vmatprep.subr.mxu0 0.0
    %423 = vmatpush1.msra.mxu0 0.0
    %424 = vmatprep.subr.mxu0 0.0
    %425 = vmatpush1.msra.mxu0 0.0
    %426 = vmatprep.subr.mxu0 0.0
    %427 = vmatpush1.msra.mxu0 0.0
    %428 = vmatprep.subr.mxu0 0.0
    %429 = vmatpush1.msra.mxu0 0.0
    %430 = vmatprep.subr.mxu0 0.0
    %431 = vmatpush1.msra.mxu0 0.0
    %432 = vmatprep.subr.mxu0 0.0
    %433 = vmatpush1.msra.mxu0 0.0
    %434 = vmatprep.mubr.f32.mxu0 0.0
    %435 = vmatmul.mubr.f32.gmra.mrb[0].mxu0 %v336
    %v436 = vpop.f32.mrb[0].mxu0
    %v437 = vadd.f32 0.0, %v436
    %v438 = vpop.f32.mrb[0].mxu0
    %439 = vmatprep.mubr.f32.mxu0 0.0
    %440 = vmatmul.mubr.f32.gmra.mrb[0].mxu0 %v341
    %v441 = vpop.f32.mrb[0].mxu0
    %v442 = vadd.f32 0.0, %v441
    %v443 = vpop.f32.mrb[0].mxu0
    %444 = vmatprep.mubr.f32.mxu0 0.0
    %445 = vmatmul.mubr.f32.gmra.mrb[0].mxu0 %v346
    %v446 = vpop.f32.mrb[0].mxu0
    %v447 = vadd.f32 0.0, %v446
    %v448 = vpop.f32.mrb[0].mxu0
    %449 = vmatprep.mubr.f32.mxu0 0.0
    %450 = vmatmul.mubr.f32.gmra.mrb[0].mxu0 %v351
    %v451 = vpop.f32.mrb[0].mxu0
    %v452 = vadd.f32 0.0, %v451
    %v453 = vpop.f32.mrb[0].mxu0
    %454 = vdwg.mxu0
    %v455 = vmul.f32 %v336, %v336
    %v456 = vmul.f32 %v341, %v341
    %v457 = vmul.f32 %v346, %v346
    %v458 = vmul.f32 %v351, %v351
    %459 = vmatprep.subr.mxu0 0.0
    %460 = vmatpush1.msra.mxu0 %v354
    %461 = vmatprep.subr.mxu0 0.0
    %462 = vmatpush1.msra.mxu0 %v355
    %463 = vmatprep.subr.mxu0 0.0
    %464 = vmatpush1.msra.mxu0 %v356
    %465 = vmatprep.subr.mxu0 0.0
    %466 = vmatpush1.msra.mxu0 %v357
    %467 = vmatprep.subr.mxu0 0.0
    %468 = vmatpush1.msra.mxu0 %v358
    %469 = vmatprep.subr.mxu0 0.0
    %470 = vmatpush1.msra.mxu0 %v359
    %471 = vmatprep.subr.mxu0 0.0
    %472 = vmatpush1.msra.mxu0 %v360
    %473 = vmatprep.subr.mxu0 0.0
    %474 = vmatpush1.msra.mxu0 %v361
    %475 = vmatprep.subr.mxu0 0.0
    %476 = vmatpush1.msra.mxu0 %v362
    %477 = vmatprep.subr.mxu0 0.0
    %478 = vmatpush1.msra.mxu0 %v363
    %479 = vmatprep.subr.mxu0 0.0
    %480 = vmatpush1.msra.mxu0 %v364
    %481 = vmatprep.subr.mxu0 0.0
    %482 = vmatpush1.msra.mxu0 %v365
    %483 = vmatprep.subr.mxu0 0.0
    %484 = vmatpush1.msra.mxu0 %v366
    %485 = vmatprep.subr.mxu0 0.0
    %486 = vmatpush1.msra.mxu0 %v367
    %487 = vmatprep.subr.mxu0 0.0
    %488 = vmatpush1.msra.mxu0 %v368
    %489 = vmatprep.subr.mxu0 0.0
    %490 = vmatpush1.msra.mxu0 %v369
    %491 = vmatprep.subr.mxu0 0.0
    %492 = vmatpush1.msra.mxu0 0.0
    %493 = vmatprep.subr.mxu0 0.0
    %494 = vmatpush1.msra.mxu0 0.0
    %495 = vmatprep.subr.mxu0 0.0
    %496 = vmatpush1.msra.mxu0 0.0
    %497 = vmatprep.subr.mxu0 0.0
    %498 = vmatpush1.msra.mxu0 0.0
    %499 = vmatprep.subr.mxu0 0.0
    %500 = vmatpush1.msra.mxu0 0.0
    %501 = vmatprep.subr.mxu0 0.0
    %502 = vmatpush1.msra.mxu0 0.0
    %503 = vmatprep.subr.mxu0 0.0
    %504 = vmatpush1.msra.mxu0 0.0
    %505 = vmatprep.subr.mxu0 0.0
    %506 = vmatpush1.msra.mxu0 0.0
    %507 = vmatprep.subr.mxu0 0.0
    %508 = vmatpush1.msra.mxu0 0.0
    %509 = vmatprep.subr.mxu0 0.0
    %510 = vmatpush1.msra.mxu0 0.0
    %511 = vmatprep.subr.mxu0 0.0
    %512 = vmatpush1.msra.mxu0 0.0
    %513 = vmatprep.subr.mxu0 0.0
    %514 = vmatpush1.msra.mxu0 0.0
    %515 = vmatprep.subr.mxu0 0.0
    %516 = vmatpush1.msra.mxu0 0.0
    %517 = vmatprep.subr.mxu0 0.0
    %518 = vmatpush1.msra.mxu0 0.0
    %519 = vmatprep.subr.mxu0 0.0
    %520 = vmatpush1.msra.mxu0 0.0
    %521 = vmatprep.subr.mxu0 0.0
    %522 = vmatpush1.msra.mxu0 0.0
    %523 = vmatprep.mubr.f32.mxu0 0.0
    %524 = vmatmul.mubr.f32.gmra.mrb[0].mxu0 %v455
    %v525 = vpop.f32.mrb[0].mxu0
    %v526 = vadd.f32 0.0, %v525
    %v527 = vpop.f32.mrb[0].mxu0
    %528 = vmatprep.mubr.f32.mxu0 0.0
    %529 = vmatmul.mubr.f32.gmra.mrb[0].mxu0 %v456
    %v530 = vpop.f32.mrb[0].mxu0
    %v531 = vadd.f32 0.0, %v530
    %v532 = vpop.f32.mrb[0].mxu0
    %533 = vmatprep.mubr.f32.mxu0 0.0
    %534 = vmatmul.mubr.f32.gmra.mrb[0].mxu0 %v457
    %v535 = vpop.f32.mrb[0].mxu0
    %v536 = vadd.f32 0.0, %v535
    %v537 = vpop.f32.mrb[0].mxu0
    %538 = vmatprep.mubr.f32.mxu0 0.0
    %539 = vmatmul.mubr.f32.gmra.mrb[0].mxu0 %v458
    %v540 = vpop.f32.mrb[0].mxu0
    %v541 = vadd.f32 0.0, %v540
    %v542 = vpop.f32.mrb[0].mxu0
    %543 = vdwg.mxu0
    %v544 = vmul.f32 %v437, %v437
    %v545 = vmul.f32 %v442, %v442
    %v546 = vmul.f32 %v447, %v447
    %v547 = vmul.f32 %v452, %v452
    %v548 = vsub.f32 %v526, %v544
    %v549 = vsub.f32 %v531, %v545
    %v550 = vsub.f32 %v536, %v546
    %v551 = vsub.f32 %v541, %v547
    %v552 = vadd.f32 %v548, 1e-05
    %v553 = vadd.f32 %v549, 1e-05
    %v554 = vadd.f32 %v550, 1e-05
    %v555 = vadd.f32 %v551, 1e-05
    %v556 = vrsqrt.pop %v552
    %v557 = vrsqrt.pop %v553
    %v558 = vrsqrt.pop %v554
    %v559 = vrsqrt.pop %v555
    %v560 = vsub.f32 %v336, %v437
    %v561 = vsub.f32 %v341, %v442
    %v562 = vsub.f32 %v346, %v447
    %v563 = vsub.f32 %v351, %v452
    %v564 = vld [vmem:[%s5] sm:$0x1]
    %v566 = vlaneseq
    %v567 = vshrl.u32 %v566, 7
    %v568 = vsub.s32 0, %v567
    %v569 = vrot.slane %v564, %v568
    %v571 = vmul.f32 %v556, %v569
    %v572 = vmul.f32 %v557, %v569
    %v573 = vmul.f32 %v558, %v569
    %v574 = vmul.f32 %v559, %v569
    %v575 = vmul.f32 %v560, %v571
    %v576 = vmul.f32 %v561, %v572
    %v577 = vmul.f32 %v562, %v573
    %v578 = vmul.f32 %v563, %v574
    %v579 = vld [vmem:[%s6] sm:$0x1]
    %v581 = vlaneseq
    %v582 = vshrl.u32 %v581, 7
    %v583 = vsub.s32 0, %v582
    %v584 = vrot.slane %v579, %v583
    %v586 = vadd.f32 %v575, %v584
    %v587 = vadd.f32 %v576, %v584
    %v588 = vadd.f32 %v577, %v584
    %v589 = vadd.f32 %v578, %v584
    %590 = vst [vmem:[#allocation10] sm:$0xff] %v586
    %591 = vst [vmem:[#allocation10 + $0x8] sm:$0xff] %v587
    %592 = vst [vmem:[#allocation10 + $0x10] sm:$0xff] %v588
    %593 = vst [vmem:[#allocation10 + $0x18] sm:$0xff] %v589
    // Predicated region
    $region50: #{tpu_custom_call.1} parent=1 // pred_check
      _
    $region51: #{tpu_custom_call.1} parent=1 // pred_check_branch
      %595 = sbr.rel (0) target = $region53
    $region52: #{tpu_custom_call.1} parent=1 // pred_region
      %s597 = ssub.s32 512, 512
      %598 = vsyncadd [#allocation4], %s597
      %s599 = sshll.u32 [#allocation10], 4
      %s600 = int_to_ptr.vmem [resolvable:$true] %s599
      %605 = dma.vmem_to_hbm [thread:$0]  %s600, 512, %s8, [#allocation4], 128, 128, 8
    $region53: #{tpu_custom_call.1} parent=1 // pred_fallthru
      _
    // Predicated region
    $region54: #{tpu_custom_call.1} parent=1 // pred_check
      _
    $region55: #{tpu_custom_call.1} parent=1 // pred_check_branch
      %607 = sbr.rel (0) target = $region57
    $region56: #{tpu_custom_call.1} parent=1 // pred_region
      %608 = dma.done [#allocation4], 512
    $region57: #{tpu_custom_call.1} parent=1 // pred_fallthru
      _
    %609 = vsyncpa [#allocation3], 1
    %610 = vsyncpa [#allocation6], 1
    %611 = vsyncpa [#allocation9], 1
    %612 = vsyncpa [#allocation4], 1

</llo_original>
